<compile_context>
chip_gen: v5e
topology: v5e:2x2
jax: 0.10.0
libtpu: 0.0.40
codegen_flags: <defaults>
</compile_context>

<pallas_src>
import functools
import math

import jax
import jax.numpy as jnp
from jax.experimental import pallas as pl
from jax.experimental.pallas import tpu as pltpu


def _round_up(x, m):
    return ((x + m - 1) // m) * m


def _default_x_budget_bytes():
    """Best-effort per-generation budget for the double-buffered X tiles."""
    try:
        kind = jax.devices()[0].device_kind.lower()
    except Exception:
        return 6 << 20
    if "v6" in kind:
        return 20 << 20          # v6e: 128 MiB VMEM -> afford larger streaming tiles
    if "v5" in kind:
        return 6 << 20           # v5e: 16 MiB default scoped VMEM
    return 8 << 20               # v7x / unknown: 64 MiB physical, stay moderate


def _set_pooler_mean_kernel(x_ref, w_ref, b_ref, o_ref, acc_ref, *, s_total, ts):
    # x_ref:   (TB, TS, Fp) native dtype, current batch tile / S chunk
    # w_ref:   (Fp, O_pad)  f32, transposed + pre-scaled by 1/S (+ k-tiled) + lane-padded
    # b_ref:   (1, O_pad)   f32, lane-padded
    # o_ref:   (TB, O_pad)  output tile (resident across the S-chunk axis)
    # acc_ref: (TB, Fp)     f32 scratch accumulator (pooled sum over S)
    s = pl.program_id(1)
    n_s = pl.num_programs(1)

    @pl.when(s == 0)
    def _init():
        acc_ref[...] = jnp.zeros_like(acc_ref)

    if s_total % ts == 0:
        # No ragged chunk: every step is a plain native-dtype sublane sum (f32 acc).
        acc_ref[...] += jnp.sum(x_ref[...], axis=1, dtype=jnp.float32)
    else:
        # Only the *last* S chunk reads past the array and needs masking.
        @pl.when(s < n_s - 1)
        def _full_chunk():
            acc_ref[...] += jnp.sum(x_ref[...], axis=1, dtype=jnp.float32)

        @pl.when(s == n_s - 1)
        def _ragged_chunk():
            x = x_ref[...]
            row = jax.lax.broadcasted_iota(jnp.int32, (ts, 1), 0)   # small (TS,1) iota
            valid = (s * ts + row) < s_total
            acc_ref[...] += jnp.sum(jnp.where(valid, x, jnp.zeros_like(x)),
                                    axis=1, dtype=jnp.float32)

    @pl.when(s == n_s - 1)
    def _finalize():
        # 1/S is folded into w_ref by the wrapper, so this is the mean-projection.
        y = jnp.dot(acc_ref[...], w_ref[...],
                    preferred_element_type=jnp.float32)        # (TB, O_pad) on MXU
        y = jnp.maximum(y + b_ref[...], 0.0)                   # bias + ReLU
        o_ref[...] = y.astype(o_ref.dtype)


def set_pooler_mean(X, w_out, b_out, *, x_buffers_budget_bytes=None):
    """SetPooler.forward(..., agg='mean') (eval): ReLU(mean(X, -2) @ w_out.T + b_out).

    X:     (B, S, F)
    w_out: (O, F)   nn.Linear weight layout
    b_out: (O,)
    Returns (out (B, O), None) to mirror the PyTorch forward.
    """
    B, S, F = X.shape
    O = w_out.shape[0]
    O_pad = _round_up(max(O, 1), 128)                 # lane-dense output / weight
    itemsize = jnp.dtype(X.dtype).itemsize
    if x_buffers_budget_bytes is None:
        x_buffers_budget_bytes = _default_x_budget_bytes()

    # ---- lane density: fold k consecutive set elements into the lane axis when
    # F is not a multiple of 128 and S divides evenly (free contiguous reshape). ----
    k = 128 // math.gcd(F, 128)
    if k > 1 and S % k == 0:
        Sp, Fp = S // k, k * F
        Xr = X.reshape(B, Sp, Fp)
    else:
        k, Sp, Fp = 1, S, F
        Xr = X

    # ---- weight prep: transpose, fold 1/S mean scale, tile k x, pad to 128 lanes. ----
    w_t = jnp.transpose(w_out).astype(jnp.float32) * (1.0 / S)        # (F, O)
    if k > 1:
        w_t = jnp.tile(w_t, (k, 1))                                   # (k*F, O)
    w_pad = jnp.zeros((Fp, O_pad), jnp.float32).at[:, :O].set(w_t)
    b_pad = jnp.zeros((1, O_pad), jnp.float32).at[:, :O].set(
        b_out.astype(jnp.float32)[None, :])

    # ---- tile selection with explicit VMEM accounting. ----
    TS_CAP = 512
    TS = Sp if Sp <= TS_CAP else TS_CAP               # full dim or multiple of 8
    rows = x_buffers_budget_bytes // (2 * TS * Fp * itemsize)
    if rows < 8 and TS > 8:
        # Shrink the S chunk (multiple of 8) instead of overshooting the budget.
        ts_new = x_buffers_budget_bytes // (2 * 8 * Fp * itemsize)
        TS = max(8, (ts_new // 8) * 8)
        rows = x_buffers_budget_bytes // (2 * TS * Fp * itemsize)
    rows = max(int(rows), 8)      # floor; only overshoots for extreme F (F is untiled)
    TB_CAP = 1024
    tb_max = min(rows, TB_CAP)
    if B <= tb_max:
        if B >= 16:
            # >=2 batch tiles so both v7x TensorCores get work on the 'parallel'
            # axis (harmless on single-core v5e/v6e).
            TB = max(8, min(_round_up(pl.cdiv(B, 2), 8), (tb_max // 8) * 8))
        else:
            TB = B                                    # block == full dim: legal
    else:
        TB = max(8, (tb_max // 8) * 8)                # multiple of 8 sublanes

    grid = (pl.cdiv(B, TB), pl.cdiv(Sp, TS))          # reduction (S) axis last

    # ---- explicit scoped-VMEM limit: 2x inputs + 2x output tile + scratch. ----
    x_bytes = 2 * TB * TS * Fp * itemsize
    w_bytes = 2 * _round_up(Fp, 8) * O_pad * 4
    b_bytes = 2 * 8 * O_pad * 4
    o_bytes = 2 * _round_up(TB, 8) * O_pad * itemsize
    acc_bytes = _round_up(TB, 8) * _round_up(Fp, 128) * 4
    vmem_need = x_bytes + w_bytes + b_bytes + o_bytes + acc_bytes
    vmem_limit = int(vmem_need * 1.3) + (2 << 20)
    vmem_limit = max(16 << 20, min(vmem_limit, 96 << 20))

    kernel = functools.partial(_set_pooler_mean_kernel, s_total=Sp, ts=TS)

    out_padded = pl.pallas_call(
        kernel,
        out_shape=jax.ShapeDtypeStruct((B, O_pad), X.dtype),
        grid_spec=pltpu.PrefetchScalarGridSpec(
            num_scalar_prefetch=0,
            grid=grid,
            in_specs=[
                pl.BlockSpec((TB, TS, Fp), lambda i, s: (i, s, 0)),   # X tile
                pl.BlockSpec((Fp, O_pad), lambda i, s: (0, 0)),       # weight (resident)
                pl.BlockSpec((1, O_pad), lambda i, s: (0, 0)),        # bias   (resident)
            ],
            out_specs=pl.BlockSpec((TB, O_pad), lambda i, s: (i, 0)),
            scratch_shapes=[pltpu.VMEM((TB, Fp), jnp.float32)],       # pooled-sum acc
        ),
        compiler_params=pltpu.CompilerParams(
            dimension_semantics=("parallel", "arbitrary"),
            vmem_limit_bytes=vmem_limit),
    )(Xr, w_pad, b_pad)

    return out_padded[:, :O], None


if __name__ == "__main__":
    # Small shapes consistent with the module's forward:
    #   X: (batch=2, set_size=8, n_features=32), out_features=16
    B, S, F, O = 2, 8, 32, 16

    key = jax.random.PRNGKey(0)
    k_x, k_w, k_b = jax.random.split(key, 3)

    X = jax.random.normal(k_x, (B, S, F), dtype=jnp.float32)
    # edge_embeddings / end_node_embedding are unused by the 'mean' branch,
    # built only to mirror the module's signature.
    edge_embeddings = jax.random.normal(k_x, (B, F), dtype=jnp.float32)
    end_node_embedding = jax.random.normal(k_x, (B, S, F), dtype=jnp.float32)

    # Deterministic init for out_proj Linear(n_features, out_features):
    # weight (O, F), bias (O,) -- uniform, akin to PyTorch default init bound.
    bound = 1.0 / (F ** 0.5)
    w_out = jax.random.uniform(k_w, (O, F), minval=-bound, maxval=bound,
                               dtype=jnp.float32)
    b_out = jax.random.uniform(k_b, (O,), minval=-bound, maxval=bound,
                               dtype=jnp.float32)

    pooler = jax.jit(set_pooler_mean, static_argnames=("x_buffers_budget_bytes",))
    out, attn_w = pooler(X, w_out, b_out)
    out = jax.block_until_ready(out)

    # Reference check in plain JAX (same math as the PyTorch eval forward).
    ref = jnp.maximum(jnp.mean(X, axis=-2) @ w_out.T + b_out, 0.0)
    assert out.shape == (B, O)
    assert jnp.allclose(out, ref, atol=1e-5, rtol=1e-5)
    assert attn_w is None

    # Second small check: exercises the multi-chunk streamed reduction with a
    # ragged (masked) last S chunk and the lane-dense (k-folded) X layout, by
    # forcing a tiny X buffer budget.
    B2, S2, F2, O2 = 4, 40, 96, 24
    k2x, k2w, k2b = jax.random.split(jax.random.PRNGKey(1), 3)
    X2 = jax.random.normal(k2x, (B2, S2, F2), dtype=jnp.float32)
    bound2 = 1.0 / (F2 ** 0.5)
    w2 = jax.random.uniform(k2w, (O2, F2), minval=-bound2, maxval=bound2,
                            dtype=jnp.float32)
    b2 = jax.random.uniform(k2b, (O2,), minval=-bound2, maxval=bound2,
                            dtype=jnp.float32)
    out2, _ = pooler(X2, w2, b2, x_buffers_budget_bytes=200_000)
    out2 = jax.block_until_ready(out2)
    ref2 = jnp.maximum(jnp.mean(X2, axis=-2) @ w2.T + b2, 0.0)
    assert out2.shape == (B2, O2)
    assert jnp.allclose(out2, ref2, atol=1e-4, rtol=1e-4)

    print("KERNEL_OK")
</pallas_src>

<mosaic_0001>
module attributes {stable_mosaic.version = 11 : i64} {
  func.func @_set_pooler_mean_kernel(%arg0: i32, %arg1: i32, %arg2: memref<2x2x128xf32, #tpu.memory_space<vmem>>, %arg3: memref<128x128xf32, #tpu.memory_space<vmem>>, %arg4: memref<1x128xf32, #tpu.memory_space<vmem>>, %arg5: memref<2x128xf32, #tpu.memory_space<vmem>>, %arg6: memref<2x128xf32, #tpu.memory_space<vmem>>) attributes {dimension_semantics = [#tpu.dimension_semantics<parallel>, #tpu.dimension_semantics<arbitrary>], iteration_bounds = array<i64: 1, 1>, scalar_prefetch = 0 : i64, scratch_operands = 1 : i64, tpu.core_type = #tpu.core_type<tc>, window_params = [{transform_indices = @transform_0, window_bounds = array<i64: 2, 2, 128>}, {pipeline_mode = #tpu.pipeline_mode<synchronous>, transform_indices = @transform_1, window_bounds = array<i64: 128, 128>}, {pipeline_mode = #tpu.pipeline_mode<synchronous>, transform_indices = @transform_2, window_bounds = array<i64: 1, 128>}, {transform_indices = @transform_3, window_bounds = array<i64: 2, 128>}]} {
    %c0_i32 = arith.constant 0 : i32
    %0 = arith.cmpi eq, %arg1, %c0_i32 : i32
    %1 = arith.extui %0 : i1 to i32
    %c0_i32_0 = arith.constant 0 : i32
    %2 = arith.cmpi ne, %1, %c0_i32_0 : i32
    scf.if %2 {
      %cst_9 = arith.constant 0.000000e+00 : f32
      %11 = vector.broadcast %cst_9 : f32 to vector<2x128xf32>
      %c0_10 = arith.constant 0 : index
      %c0_11 = arith.constant 0 : index
      %12 = vector.load %arg6[%c0_10, %c0_11] : memref<2x128xf32, #tpu.memory_space<vmem>>, vector<2x128xf32>
      tpu.vector_store %arg6[%c0_10, %c0_11], %11 {strides = array<i32>} : memref<2x128xf32, #tpu.memory_space<vmem>>, vector<2x128xf32>,
    } else {
    }
    %c0 = arith.constant 0 : index
    %c0_1 = arith.constant 0 : index
    %3 = vector.load %arg6[%c0, %c0_1] : memref<2x128xf32, #tpu.memory_space<vmem>>, vector<2x128xf32>
    %c0_2 = arith.constant 0 : index
    %c0_3 = arith.constant 0 : index
    %c0_4 = arith.constant 0 : index
    %4 = vector.load %arg2[%c0_2, %c0_3, %c0_4] : memref<2x2x128xf32, #tpu.memory_space<vmem>>, vector<2x2x128xf32>
    %cst = arith.constant dense<0.000000e+00> : vector<2x128xf32>
    %5 = vector.multi_reduction <add>, %4, %cst [1] : vector<2x2x128xf32> to vector<2x128xf32>
    %6 = arith.addf %3, %5 : vector<2x128xf32>
    %c0_5 = arith.constant 0 : index
    %c0_6 = arith.constant 0 : index
    %7 = vector.load %arg6[%c0_5, %c0_6] : memref<2x128xf32, #tpu.memory_space<vmem>>, vector<2x128xf32>
    tpu.vector_store %arg6[%c0_5, %c0_6], %6 {strides = array<i32>} : memref<2x128xf32, #tpu.memory_space<vmem>>, vector<2x128xf32>,
    %c0_i32_7 = arith.constant 0 : i32
    %8 = arith.cmpi eq, %arg1, %c0_i32_7 : i32
    %9 = arith.extui %8 : i1 to i32
    %c0_i32_8 = arith.constant 0 : i32
    %10 = arith.cmpi ne, %9, %c0_i32_8 : i32
    scf.if %10 {
      %c0_9 = arith.constant 0 : index
      %c0_10 = arith.constant 0 : index
      %11 = vector.load %arg6[%c0_9, %c0_10] : memref<2x128xf32, #tpu.memory_space<vmem>>, vector<2x128xf32>
      %c0_11 = arith.constant 0 : index
      %c0_12 = arith.constant 0 : index
      %12 = vector.load %arg3[%c0_11, %c0_12] : memref<128x128xf32, #tpu.memory_space<vmem>>, vector<128x128xf32>
      %cst_13 = arith.constant dense<0.000000e+00> : vector<2x128xf32>
      %13 = tpu.matmul %11, %12, %cst_13 {dimension_numbers = #tpu.dot_dimension_numbers<[1], [0], [0], [1], [0, 0, 1, 1], [], []>} : vector<2x128xf32>, vector<128x128xf32>, vector<2x128xf32> -> vector<2x128xf32>
      %c0_14 = arith.constant 0 : index
      %c0_15 = arith.constant 0 : index
      %14 = vector.load %arg4[%c0_14, %c0_15] : memref<1x128xf32, #tpu.memory_space<vmem>>, vector<1x128xf32>
      %15 = vector.broadcast %14 : vector<1x128xf32> to vector<2x128xf32>
      %16 = arith.addf %13, %15 : vector<2x128xf32>
      %cst_16 = arith.constant 0.000000e+00 : f32
      %17 = vector.broadcast %cst_16 : f32 to vector<2x128xf32>
      %18 = arith.maximumf %16, %17 : vector<2x128xf32>
      %c0_17 = arith.constant 0 : index
      %c0_18 = arith.constant 0 : index
      %19 = vector.load %arg5[%c0_17, %c0_18] : memref<2x128xf32, #tpu.memory_space<vmem>>, vector<2x128xf32>
      tpu.vector_store %arg5[%c0_17, %c0_18], %18 {strides = array<i32>} : memref<2x128xf32, #tpu.memory_space<vmem>>, vector<2x128xf32>,
    } else {
    }
    return
  }
  func.func @transform_0(%arg0: i32, %arg1: i32) -> (i32, i32, i32) {
    %c0_i32 = arith.constant 0 : i32
    %c0_i32_0 = arith.constant 0 : i32
    return %arg0, %arg1, %c0_i32 : i32, i32, i32
  }
  func.func @transform_1(%arg0: i32, %arg1: i32) -> (i32, i32) {
    %c0_i32 = arith.constant 0 : i32
    %c0_i32_0 = arith.constant 0 : i32
    %c0_i32_1 = arith.constant 0 : i32
    return %c0_i32, %c0_i32_0 : i32, i32
  }
  func.func @transform_2(%arg0: i32, %arg1: i32) -> (i32, i32) {
    %c0_i32 = arith.constant 0 : i32
    %c0_i32_0 = arith.constant 0 : i32
    %c0_i32_1 = arith.constant 0 : i32
    return %c0_i32, %c0_i32_0 : i32, i32
  }
  func.func @transform_3(%arg0: i32, %arg1: i32) -> (i32, i32) {
    %c0_i32 = arith.constant 0 : i32
    %c0_i32_0 = arith.constant 0 : i32
    return %arg0, %c0_i32 : i32, i32
  }
}

</mosaic_0001>

<llo_original>
// kernel: set_pooler_mean.1
$region0: #{set_pooler_mean.1}
  #allocation0 [shape = 'u32[]', space=smem, size = 0x4, offset = 0x4, fixed_abs, tag = 'smem constant byte address 0x4 - core index']
  #allocation1 [shape = 'u32[72,128]{1,0:T(1,128)}', space=vmem, size = 0x9000, scoped, tag = 'internal scratch']
  #allocation2 [shape = 'f32[2,128]{1,0:T(2,128)}', space=vmem, size = 0x400, scoped, tag = 'scratch operand']
  %s0 = inlined_call_operand.vmem [shape: f32[2,2,128], index: 0, kind: input, shape index: {}]
  %s1 = inlined_call_operand.vmem [shape: f32[128,128], index: 1, kind: input, shape index: {}]
  %s2 = inlined_call_operand.vmem [shape: f32[1,128], index: 2, kind: input, shape index: {}]
  %s3 = inlined_call_operand.hbm [shape: f32[2,128], index: 3, kind: output, shape index: {}]
  %s4 = sld [smem:[#allocation0]]
  $region30: #{set_pooler_mean.1} parent=0
    _
  %s6 = ssub.s32 1, %s4
  %s7 = scalar_select 0, %s6, %s4
  $region1: #{set_pooler_mean.1} parent=0
    #allocation3 [shape = 'u8[1024]{0}', space=vmem, size = 0x400, scoped, tag = 'output window, operand 0, single buffered']
    #allocation4 [shape = 's32[1]{0}', space=sflag, size = 0x4, scoped, tag = 'scoped memory for set_pooler_mean.1']
    %8 = vsyncpa [#allocation4], 0
    // Predicated region
    $region2: #{set_pooler_mean.1} parent=1 // pred_check
      _
    $region3: #{set_pooler_mean.1} parent=1 // pred_check_branch
      %10 = sbr.rel (0) target = $region5
    $region4: #{set_pooler_mean.1} parent=1 // pred_region
      _
    $region5: #{set_pooler_mean.1} parent=1 // pred_fallthru
      _
    // Predicated region
    $region6: #{set_pooler_mean.1} parent=1 // pred_check
      _
    $region7: #{set_pooler_mean.1} parent=1 // pred_check_branch
      %12 = sbr.rel (0) target = $region9
    $region8: #{set_pooler_mean.1} parent=1 // pred_region
      _
    $region9: #{set_pooler_mean.1} parent=1 // pred_fallthru
      _
    // Predicated region
    $region10: #{set_pooler_mean.1} parent=1 // pred_check
      _
    $region11: #{set_pooler_mean.1} parent=1 // pred_check_branch
      %14 = sbr.rel (0) target = $region13
    $region12: #{set_pooler_mean.1} parent=1 // pred_region
      _
    $region13: #{set_pooler_mean.1} parent=1 // pred_fallthru
      _
    %p15 = scmp.eq.s32.totalorder 0, 0
    // Predicated region
    $region14: #{set_pooler_mean.1} parent=1 // pred_check
      %p16 = pneg %p15
    $region15: #{set_pooler_mean.1} parent=1 // pred_check_branch
      %18 = sbr.rel (%p16) target = $region17
    $region16: #{set_pooler_mean.1} parent=1 // pred_region
      %19 = vst [vmem:[#allocation2] sm:$0x3] 0.0
    $region17: #{set_pooler_mean.1} parent=1 // pred_fallthru
      _
    %v20 = vld [vmem:[#allocation2] sm:$0x3]
    %v21 = vld [vmem:[%s0] sm:$0x3]
    %v22 = vld [vmem:[%s0 + $0x2] sm:$0x3]
    %vm23 = vcmask 1041408
    %v24 = vsel %vm23, %v21, 0.0
    %v25 = vrot.slane %v24, 4
    %v26 = vadd.f32 %v24, %v25
    %v27 = vrot.slane %v26, 2
    %v28 = vadd.f32 %v26, %v27
    %v29 = vrot.slane %v28, 1
    %v30 = vadd.f32 %v28, %v29
    %v31 = vsel %vm23, %v22, 0.0
    %v32 = vrot.slane %v31, 4
    %v33 = vadd.f32 %v31, %v32
    %v34 = vrot.slane %v33, 2
    %v35 = vadd.f32 %v33, %v34
    %v36 = vrot.slane %v35, 1
    %v37 = vadd.f32 %v35, %v36
    %vm40 = vcmask 1041409
    %v41 = vsel %vm40, %v37, %v30
    %v43 = vadd.f32 %v20, %v41
    %44 = vst [vmem:[#allocation2] sm:$0x3] %v43
    // Predicated region
    $region18: #{set_pooler_mean.1} parent=1 // pred_check
      %p45 = pneg %p15
    $region19: #{set_pooler_mean.1} parent=1 // pred_check_branch
      %47 = sbr.rel (%p45) target = $region21
    $region20: #{set_pooler_mean.1} parent=1 // pred_region
      %v48 = vld [vmem:[#allocation2] sm:$0x3]
      %v49 = vld [vmem:[%s1] sm:$0xff]
      %v50 = vld [vmem:[%s1 + $0x8] sm:$0xff]
      %v51 = vld [vmem:[%s1 + $0x10] sm:$0xff]
      %v52 = vld [vmem:[%s1 + $0x18] sm:$0xff]
      %v53 = vld [vmem:[%s1 + $0x20] sm:$0xff]
      %v54 = vld [vmem:[%s1 + $0x28] sm:$0xff]
      %v55 = vld [vmem:[%s1 + $0x30] sm:$0xff]
      %v56 = vld [vmem:[%s1 + $0x38] sm:$0xff]
      %v57 = vld [vmem:[%s1 + $0x40] sm:$0xff]
      %v58 = vld [vmem:[%s1 + $0x48] sm:$0xff]
      %v59 = vld [vmem:[%s1 + $0x50] sm:$0xff]
      %v60 = vld [vmem:[%s1 + $0x58] sm:$0xff]
      %v61 = vld [vmem:[%s1 + $0x60] sm:$0xff]
      %v62 = vld [vmem:[%s1 + $0x68] sm:$0xff]
      %v63 = vld [vmem:[%s1 + $0x70] sm:$0xff]
      %v64 = vld [vmem:[%s1 + $0x78] sm:$0xff]
      %v65 = vld [vmem:[%s2] sm:$0x1]
      %v67 = vperm.slane %v65, 0
      %69 = vmatpush.msra.mxu0 %v64
      %70 = vmatpush.msra.mxu0 %v63
      %71 = vmatpush.msra.mxu0 %v62
      %72 = vmatpush.msra.mxu0 %v61
      %73 = vmatpush.msra.mxu0 %v60
      %74 = vmatpush.msra.mxu0 %v59
      %75 = vmatpush.msra.mxu0 %v58
      %76 = vmatpush.msra.mxu0 %v57
      %77 = vmatpush.msra.mxu0 %v56
      %78 = vmatpush.msra.mxu0 %v55
      %79 = vmatpush.msra.mxu0 %v54
      %80 = vmatpush.msra.mxu0 %v53
      %81 = vmatpush.msra.mxu0 %v52
      %82 = vmatpush.msra.mxu0 %v51
      %83 = vmatpush.msra.mxu0 %v50
      %84 = vmatpush.msra.mxu0 %v49
      %85 = vmatmul.f32.gmra.mxu0 %v48
      %v86 = vpop.f32.mrf.mxu0
      %v87 = vadd.f32 %v67, %v86
      %88 = vdwg.mxu0
      %v89 = vmax.f32 %v87, 0.0
      %90 = vst [vmem:[#allocation3] sm:$0x3] %v89
    $region21: #{set_pooler_mean.1} parent=1 // pred_fallthru
      _
    // Predicated region
    $region22: #{set_pooler_mean.1} parent=1 // pred_check
      _
    $region23: #{set_pooler_mean.1} parent=1 // pred_check_branch
      %92 = sbr.rel (0) target = $region25
    $region24: #{set_pooler_mean.1} parent=1 // pred_region
      %94 = vsyncadd [#allocation4], 0
      %s96 = sshll.u32 [#allocation3], 4
      %s97 = int_to_ptr.vmem [resolvable:$true] %s96
      %s98 = sshll.u32 %s3, 4
      %s99 = int_to_ptr.hbm [resolvable:$true] %s98
      %101 = dma.vmem_to_hbm [thread:$0]  %s97, 32, %s99, [#allocation4]
    $region25: #{set_pooler_mean.1} parent=1 // pred_fallthru
      _
    // Predicated region
    $region26: #{set_pooler_mean.1} parent=1 // pred_check
      _
    $region27: #{set_pooler_mean.1} parent=1 // pred_check_branch
      %103 = sbr.rel (0) target = $region29
    $region28: #{set_pooler_mean.1} parent=1 // pred_region
      %105 = dma.done [#allocation4], 32
    $region29: #{set_pooler_mean.1} parent=1 // pred_fallthru
      _
    %106 = vsyncpa [#allocation4], 1

</llo_original>
